<compile_context>
chip_gen: v7x
topology: tpu7x:2x2x1
jax: 0.10.0
libtpu: 0.0.40
codegen_flags: <defaults>
</compile_context>

<pallas_src>
import math

import jax
import jax.numpy as jnp
from jax.experimental import pallas as pl
from jax.experimental.pallas import tpu as pltpu

EPS = 1e-5

# Cached result of whether this JAX build accepts pipeline_mode=pl.Buffered(1).
_SINGLE_BUFFER_OK = None


def _round_up(a, m):
    return (a + m - 1) // m * m


def _sublane_multiple(dtype):
    # Rows per vreg sublane group: 8 for f32, 16 for bf16, 32 for int8/fp8.
    return max(8, 32 // jnp.dtype(dtype).itemsize)


def _vmem_capacity_bytes():
    try:
        return int(pltpu.get_tpu_info().vmem_capacity_bytes)
    except Exception:
        return 128 << 20  # conservative fallback (v5e/v6e); v7x reports 64 MiB above


def _layer_norm(y, gamma, beta):
    mean = jnp.mean(y, axis=-1, keepdims=True)
    centered = y - mean
    var = jnp.mean(centered * centered, axis=-1, keepdims=True)
    return centered * jax.lax.rsqrt(var + EPS) * gamma + beta


# --------------------------------------------------------------------------- #
# Kernels
# --------------------------------------------------------------------------- #
def ffn_kernel_resident(x_ref, w1_ref, b1_ref, w2_ref, b2_ref, g_ref, be_ref, o_ref):
    # x_ref: (TM, D)  w1_ref: (D, F)  b1_ref: (1, F)
    # w2_ref: (F, D)  b2_ref/g_ref/be_ref: (1, D)
    x = x_ref[...]  # native dtype -> MXU bf16 path when inputs are bf16

    h = jnp.dot(x, w1_ref[...], preferred_element_type=jnp.float32)
    h = jnp.maximum(h + b1_ref[...].astype(jnp.float32), 0.0)

    # dropout: nn.Dropout is identity at inference time; implemented as a no-op.
    # TODO(synk): training-mode dropout would use pltpu.prng_seed/prng_random_bits.

    y = jnp.dot(h.astype(w2_ref.dtype), w2_ref[...],
                preferred_element_type=jnp.float32)
    y = y + b2_ref[...].astype(jnp.float32) + x.astype(jnp.float32)

    out = _layer_norm(y, g_ref[...].astype(jnp.float32), be_ref[...].astype(jnp.float32))
    o_ref[...] = out.astype(o_ref.dtype)


def ffn_kernel_fchunked(x_ref, w1_ref, b1_ref, w2_ref, b2_ref, g_ref, be_ref,
                        o_ref, acc_ref):
    # Grid = (row tiles, F chunks). acc_ref: (TM, D) f32 scratch accumulator.
    f = pl.program_id(1)

    @pl.when(f == 0)
    def _():
        acc_ref[...] = jnp.zeros_like(acc_ref)

    x = x_ref[...]
    h = jnp.dot(x, w1_ref[...], preferred_element_type=jnp.float32)
    h = jnp.maximum(h + b1_ref[...].astype(jnp.float32), 0.0)
    acc_ref[...] += jnp.dot(h.astype(w2_ref.dtype), w2_ref[...],
                            preferred_element_type=jnp.float32)

    @pl.when(f == pl.num_programs(1) - 1)
    def _():
        y = acc_ref[...] + b2_ref[...].astype(jnp.float32) + x.astype(jnp.float32)
        out = _layer_norm(y, g_ref[...].astype(jnp.float32),
                          be_ref[...].astype(jnp.float32))
        o_ref[...] = out.astype(o_ref.dtype)


# --------------------------------------------------------------------------- #
# Wrapper
# --------------------------------------------------------------------------- #
def simple_feed_forward(x, w1, b1, w2, b2, gamma, beta, *, row_tile=None, f_chunk=None):
    """x: (B, S, D). w1: (D, 2D), b1: (2D,), w2: (2D, D), b2/gamma/beta: (D,).

    Weights are stored pre-transposed (W1 as (D, F), W2 as (F, D)) so the kernel
    runs plain row-major MXU matmuls.
    """
    B, S, D = x.shape
    F = w1.shape[1]
    N = B * S
    x2d = x.reshape(N, D)

    w_itemsize = jnp.dtype(w1.dtype).itemsize
    x_itemsize = jnp.dtype(x.dtype).itemsize
    cap = _vmem_capacity_bytes()
    headroom = 8 << 20
    scoped_floor = min(32 << 20, cap // 2)   # never request less than scoped default

    # --- row tile: dtype-dependent sublane alignment, larger tiles for large N ---
    sub = _sublane_multiple(x.dtype)
    if row_tile is None:
        row_tile = 512 if N >= 2048 else 256   # fewer grid steps amortize ~0.35us/step
    tm = min(row_tile, _round_up(N, sub))
    tm = _round_up(tm, sub)
    n_pad = _round_up(N, tm)
    if n_pad != N:
        # Pad ragged token counts with zero rows; sliced off afterwards.
        x2d = jnp.pad(x2d, ((0, n_pad - N), (0, 0)))

    # --- resident vs F-chunked weights ---
    bytes_w_resident = (w1.size + w2.size) * w_itemsize
    use_chunked = (f_chunk is not None and f_chunk < F) or \
                  (bytes_w_resident > int(0.4 * cap))
    if use_chunked:
        if f_chunk is not None and F % f_chunk == 0 and (f_chunk % 128 == 0 or f_chunk == F):
            tf = f_chunk
        elif F % 128 == 0:
            # Largest multiple of 128 dividing F whose double-buffered slabs fit
            # ~1/4 of VMEM.
            budget = max(cap // 4, 8 << 20)
            tf = 128
            for cand in range(128, F + 1, 128):
                if F % cand == 0 and 2 * 2 * cand * D * w_itemsize <= budget:
                    tf = cand
        else:
            use_chunked = False  # cannot chunk F cleanly; fall back to resident
    if use_chunked and tf >= F:
        use_chunked = False

    b1_2d = b1.reshape(1, F)
    b2_2d = b2.reshape(1, D)
    g_2d = gamma.reshape(1, D)
    be_2d = beta.reshape(1, D)
    itm = lambda a: a.size * a.dtype.itemsize

    # ------------------------- resident-weight variant ------------------------ #
    def build_resident(single_buffer):
        def inv_spec(shape):
            if single_buffer:
                return pl.BlockSpec(shape, lambda i: (0, 0), pipeline_mode=pl.Buffered(1))
            return pl.BlockSpec(shape, lambda i: (0, 0))

        wfac = 1 if single_buffer else 2
        vmem = (wfac * (itm(w1) + itm(w2))                       # resident weights
                + wfac * (itm(b1_2d) + itm(b2_2d) + itm(g_2d) + itm(be_2d))
                + 2 * 2 * tm * D * x_itemsize                    # x in + out, double-buffered
                + tm * F * 4 + tm * F * w_itemsize               # h (f32) + h cast for matmul2
                + 2 * tm * D * 4                                 # y / LN intermediates
                + (6 << 20))                                     # regalloc / spill margin
        vmem = max(min(vmem, cap - headroom), scoped_floor)

        cost = pl.CostEstimate(
            flops=4 * n_pad * D * F,
            transcendentals=n_pad,
            bytes_accessed=(2 * n_pad * D * x_itemsize + itm(w1) + itm(w2)
                            + itm(b1_2d) + itm(b2_2d) + itm(g_2d) + itm(be_2d)))

        return pl.pallas_call(
            ffn_kernel_resident,
            out_shape=jax.ShapeDtypeStruct((n_pad, D), x.dtype),
            grid_spec=pltpu.PrefetchScalarGridSpec(
                num_scalar_prefetch=0,
                grid=(n_pad // tm,),
                in_specs=[
                    pl.BlockSpec((tm, D), lambda i: (i, 0)),   # x rows (streamed)
                    inv_spec((D, F)),                          # W1 (resident)
                    inv_spec((1, F)),                          # b1
                    inv_spec((F, D)),                          # W2 (resident)
                    inv_spec((1, D)),                          # b2
                    inv_spec((1, D)),                          # gamma
                    inv_spec((1, D)),                          # beta
                ],
                out_specs=pl.BlockSpec((tm, D), lambda i: (i, 0)),
            ),
            compiler_params=pltpu.CompilerParams(
                # TODO(synk): on v7x, profile and switch the row axis to
                # pltpu.CORE_PARALLEL if it does not split across both TCs.
                dimension_semantics=("parallel",),
                vmem_limit_bytes=int(vmem)),
            cost_estimate=cost,
        )

    # --------------------------- F-chunked variant ---------------------------- #
    def build_chunked(single_buffer):
        def inv_spec(shape):
            if single_buffer:
                return pl.BlockSpec(shape, lambda i, f: (0, 0),
                                    pipeline_mode=pl.Buffered(1))
            return pl.BlockSpec(shape, lambda i, f: (0, 0))

        pfac = 1 if single_buffer else 2
        vmem = (2 * 2 * tf * D * w_itemsize                      # W1/W2 slabs, double-buffered
                + 2 * 2 * tf * w_itemsize                        # b1 slab
                + pfac * (itm(b2_2d) + itm(g_2d) + itm(be_2d))   # small resident params
                + 2 * 2 * tm * D * x_itemsize                    # x in + out, double-buffered
                + tm * D * 4                                     # f32 accumulator scratch
                + tm * tf * 4 + tm * tf * w_itemsize             # h chunk (f32) + cast copy
                + 2 * tm * D * 4                                 # LN intermediates
                + (6 << 20))
        vmem = max(min(vmem, cap - headroom), scoped_floor)

        cost = pl.CostEstimate(
            flops=4 * n_pad * D * F,
            transcendentals=n_pad,
            bytes_accessed=(2 * n_pad * D * x_itemsize
                            + (n_pad // tm) * (itm(w1) + itm(w2))  # weights re-streamed/row tile
                            + itm(b1_2d) + itm(b2_2d) + itm(g_2d) + itm(be_2d)))

        return pl.pallas_call(
            ffn_kernel_fchunked,
            out_shape=jax.ShapeDtypeStruct((n_pad, D), x.dtype),
            grid_spec=pltpu.PrefetchScalarGridSpec(
                num_scalar_prefetch=0,
                grid=(n_pad // tm, F // tf),
                in_specs=[
                    pl.BlockSpec((tm, D), lambda i, f: (i, 0)),   # x (resident across f)
                    pl.BlockSpec((D, tf), lambda i, f: (0, f)),   # W1 column slab
                    pl.BlockSpec((1, tf), lambda i, f: (0, f)),   # b1 slab
                    pl.BlockSpec((tf, D), lambda i, f: (f, 0)),   # W2 row slab
                    inv_spec((1, D)),                             # b2
                    inv_spec((1, D)),                             # gamma
                    inv_spec((1, D)),                             # beta
                ],
                out_specs=pl.BlockSpec((tm, D), lambda i, f: (i, 0)),
                scratch_shapes=[pltpu.VMEM((tm, D), jnp.float32)],
            ),
            compiler_params=pltpu.CompilerParams(
                dimension_semantics=("parallel", "arbitrary"),
                vmem_limit_bytes=int(vmem)),
            cost_estimate=cost,
        )

    build = build_chunked if use_chunked else build_resident
    args = (x2d, w1, b1_2d, w2, b2_2d, g_2d, be_2d)

    global _SINGLE_BUFFER_OK
    if _SINGLE_BUFFER_OK is None:
        try:
            out2d = build(True)(*args)
            _SINGLE_BUFFER_OK = True
        except Exception:
            # Older JAX builds may reject Buffered(1); fall back to defaults.
            _SINGLE_BUFFER_OK = False
            out2d = build(False)(*args)
    else:
        out2d = build(_SINGLE_BUFFER_OK)(*args)

    return out2d[:N].reshape(B, S, D)


def reference_ffn(x, w1, b1, w2, b2, gamma, beta):
    """Pure-JAX reference matching the PyTorch forward (eval mode)."""
    h = jnp.maximum(x @ w1 + b1, 0.0)
    y = h @ w2 + b2 + x
    mean = jnp.mean(y, axis=-1, keepdims=True)
    var = jnp.mean((y - mean) ** 2, axis=-1, keepdims=True)
    return (y - mean) / jnp.sqrt(var + EPS) * gamma + beta


if __name__ == "__main__":
    # ---- Test 1: resident-weights path (small d_model) ----
    B, S, D = 2, 8, 32            # batch=2, seq=8, d_model=32
    F = D * 2                     # d_ff = 64

    key = jax.random.PRNGKey(0)
    kx, k1, kb1, k2, kb2 = jax.random.split(key, 5)
    x = jax.random.normal(kx, (B, S, D), dtype=jnp.float32)

    lim1 = 1.0 / math.sqrt(D)
    lim2 = 1.0 / math.sqrt(F)
    w1 = jax.random.uniform(k1, (D, F), minval=-lim1, maxval=lim1, dtype=jnp.float32)
    b1 = jax.random.uniform(kb1, (F,), minval=-lim1, maxval=lim1, dtype=jnp.float32)
    w2 = jax.random.uniform(k2, (F, D), minval=-lim2, maxval=lim2, dtype=jnp.float32)
    b2 = jax.random.uniform(kb2, (D,), minval=-lim2, maxval=lim2, dtype=jnp.float32)
    gamma = jnp.ones((D,), dtype=jnp.float32)
    beta = jnp.zeros((D,), dtype=jnp.float32)

    out = jax.block_until_ready(simple_feed_forward(x, w1, b1, w2, b2, gamma, beta))
    ref = reference_ffn(x, w1, b1, w2, b2, gamma, beta)
    assert out.shape == (B, S, D)
    assert jnp.allclose(out, ref, atol=1e-5, rtol=1e-5), float(jnp.max(jnp.abs(out - ref)))

    # ---- Test 2: F-chunked reduction path (forced), ragged N, multi row tile ----
    B2, S2, D2 = 2, 50, 128       # N = 100 -> padded to 128 with tm = 64
    F2 = D2 * 2                   # 256 -> two F chunks of 128
    kx2, k12, kb12, k22, kb22 = jax.random.split(jax.random.PRNGKey(0), 5)
    x2 = jax.random.normal(kx2, (B2, S2, D2), dtype=jnp.float32)
    lim1 = 1.0 / math.sqrt(D2)
    lim2 = 1.0 / math.sqrt(F2)
    w1_2 = jax.random.uniform(k12, (D2, F2), minval=-lim1, maxval=lim1, dtype=jnp.float32)
    b1_2 = jax.random.uniform(kb12, (F2,), minval=-lim1, maxval=lim1, dtype=jnp.float32)
    w2_2 = jax.random.uniform(k22, (F2, D2), minval=-lim2, maxval=lim2, dtype=jnp.float32)
    b2_2 = jax.random.uniform(kb22, (D2,), minval=-lim2, maxval=lim2, dtype=jnp.float32)
    gamma2 = jnp.ones((D2,), dtype=jnp.float32)
    beta2 = jnp.zeros((D2,), dtype=jnp.float32)

    out2 = jax.block_until_ready(
        simple_feed_forward(x2, w1_2, b1_2, w2_2, b2_2, gamma2, beta2,
                            row_tile=64, f_chunk=128))
    ref2 = reference_ffn(x2, w1_2, b1_2, w2_2, b2_2, gamma2, beta2)
    assert out2.shape == (B2, S2, D2)
    assert jnp.allclose(out2, ref2, atol=1e-4, rtol=1e-4), \
        float(jnp.max(jnp.abs(out2 - ref2)))

    print("KERNEL_OK")
</pallas_src>

<mosaic_0001>
module attributes {stable_mosaic.version = 11 : i64} {
  func.func @ffn_kernel_resident(%arg0: i32, %arg1: memref<16x32xf32, #tpu.memory_space<vmem>>, %arg2: memref<32x64xf32, #tpu.memory_space<vmem>>, %arg3: memref<1x64xf32, #tpu.memory_space<vmem>>, %arg4: memref<64x32xf32, #tpu.memory_space<vmem>>, %arg5: memref<1x32xf32, #tpu.memory_space<vmem>>, %arg6: memref<1x32xf32, #tpu.memory_space<vmem>>, %arg7: memref<1x32xf32, #tpu.memory_space<vmem>>, %arg8: memref<16x32xf32, #tpu.memory_space<vmem>>) attributes {dimension_semantics = [#tpu.dimension_semantics<parallel>], iteration_bounds = array<i64: 1>, scalar_prefetch = 0 : i64, scratch_operands = 0 : i64, tpu.core_type = #tpu.core_type<tc>, window_params = [{transform_indices = @transform_0, window_bounds = array<i64: 16, 32>}, {pipeline_mode = #tpu.pipeline_mode<synchronous>, transform_indices = @transform_1, window_bounds = array<i64: 32, 64>}, {pipeline_mode = #tpu.pipeline_mode<synchronous>, transform_indices = @transform_2, window_bounds = array<i64: 1, 64>}, {pipeline_mode = #tpu.pipeline_mode<synchronous>, transform_indices = @transform_3, window_bounds = array<i64: 64, 32>}, {pipeline_mode = #tpu.pipeline_mode<synchronous>, transform_indices = @transform_4, window_bounds = array<i64: 1, 32>}, {pipeline_mode = #tpu.pipeline_mode<synchronous>, transform_indices = @transform_5, window_bounds = array<i64: 1, 32>}, {pipeline_mode = #tpu.pipeline_mode<synchronous>, transform_indices = @transform_6, window_bounds = array<i64: 1, 32>}, {transform_indices = @transform_7, window_bounds = array<i64: 16, 32>}]} {
    %c0 = arith.constant 0 : index
    %c0_0 = arith.constant 0 : index
    %0 = vector.load %arg1[%c0, %c0_0] : memref<16x32xf32, #tpu.memory_space<vmem>>, vector<16x32xf32>
    %c0_1 = arith.constant 0 : index
    %c0_2 = arith.constant 0 : index
    %1 = vector.load %arg2[%c0_1, %c0_2] : memref<32x64xf32, #tpu.memory_space<vmem>>, vector<32x64xf32>
    %cst = arith.constant dense<0.000000e+00> : vector<16x64xf32>
    %2 = tpu.matmul %0, %1, %cst {dimension_numbers = #tpu.dot_dimension_numbers<[1], [0], [0], [1], [0, 0, 1, 1], [], []>} : vector<16x32xf32>, vector<32x64xf32>, vector<16x64xf32> -> vector<16x64xf32>
    %c0_3 = arith.constant 0 : index
    %c0_4 = arith.constant 0 : index
    %3 = vector.load %arg3[%c0_3, %c0_4] : memref<1x64xf32, #tpu.memory_space<vmem>>, vector<1x64xf32>
    %4 = vector.broadcast %3 : vector<1x64xf32> to vector<16x64xf32>
    %5 = arith.addf %2, %4 : vector<16x64xf32>
    %cst_5 = arith.constant 0.000000e+00 : f32
    %6 = vector.broadcast %cst_5 : f32 to vector<16x64xf32>
    %7 = arith.maximumf %5, %6 : vector<16x64xf32>
    %c0_6 = arith.constant 0 : index
    %c0_7 = arith.constant 0 : index
    %8 = vector.load %arg4[%c0_6, %c0_7] : memref<64x32xf32, #tpu.memory_space<vmem>>, vector<64x32xf32>
    %cst_8 = arith.constant dense<0.000000e+00> : vector<16x32xf32>
    %9 = tpu.matmul %7, %8, %cst_8 {dimension_numbers = #tpu.dot_dimension_numbers<[1], [0], [0], [1], [0, 0, 1, 1], [], []>} : vector<16x64xf32>, vector<64x32xf32>, vector<16x32xf32> -> vector<16x32xf32>
    %c0_9 = arith.constant 0 : index
    %c0_10 = arith.constant 0 : index
    %10 = vector.load %arg5[%c0_9, %c0_10] : memref<1x32xf32, #tpu.memory_space<vmem>>, vector<1x32xf32>
    %11 = vector.broadcast %10 : vector<1x32xf32> to vector<16x32xf32>
    %12 = arith.addf %9, %11 : vector<16x32xf32>
    %13 = arith.addf %12, %0 : vector<16x32xf32>
    %c0_11 = arith.constant 0 : index
    %c0_12 = arith.constant 0 : index
    %14 = vector.load %arg6[%c0_11, %c0_12] : memref<1x32xf32, #tpu.memory_space<vmem>>, vector<1x32xf32>
    %c0_13 = arith.constant 0 : index
    %c0_14 = arith.constant 0 : index
    %15 = vector.load %arg7[%c0_13, %c0_14] : memref<1x32xf32, #tpu.memory_space<vmem>>, vector<1x32xf32>
    %cst_15 = arith.constant dense<0.000000e+00> : vector<16xf32>
    %16 = vector.multi_reduction <add>, %13, %cst_15 [1] : vector<16x32xf32> to vector<16xf32>
    %17 = vector.shape_cast %16 : vector<16xf32> to vector<16x1xf32>
    %cst_16 = arith.constant 3.200000e+01 : f32
    %18 = vector.broadcast %cst_16 : f32 to vector<16x1xf32>
    %19 = arith.divf %17, %18 : vector<16x1xf32>
    %20 = vector.broadcast %19 : vector<16x1xf32> to vector<16x32xf32>
    %21 = arith.subf %13, %20 : vector<16x32xf32>
    %22 = arith.mulf %21, %21 : vector<16x32xf32>
    %cst_17 = arith.constant dense<0.000000e+00> : vector<16xf32>
    %23 = vector.multi_reduction <add>, %22, %cst_17 [1] : vector<16x32xf32> to vector<16xf32>
    %24 = vector.shape_cast %23 : vector<16xf32> to vector<16x1xf32>
    %cst_18 = arith.constant 3.200000e+01 : f32
    %25 = vector.broadcast %cst_18 : f32 to vector<16x1xf32>
    %26 = arith.divf %24, %25 : vector<16x1xf32>
    %cst_19 = arith.constant 9.99999974E-6 : f32
    %27 = vector.broadcast %cst_19 : f32 to vector<16x1xf32>
    %28 = arith.addf %26, %27 : vector<16x1xf32>
    %29 = math.rsqrt %28 : vector<16x1xf32>
    %30 = vector.broadcast %29 : vector<16x1xf32> to vector<16x32xf32>
    %31 = arith.mulf %21, %30 : vector<16x32xf32>
    %32 = vector.broadcast %14 : vector<1x32xf32> to vector<16x32xf32>
    %33 = arith.mulf %31, %32 : vector<16x32xf32>
    %34 = vector.broadcast %15 : vector<1x32xf32> to vector<16x32xf32>
    %35 = arith.addf %33, %34 : vector<16x32xf32>
    %c0_20 = arith.constant 0 : index
    %c0_21 = arith.constant 0 : index
    %36 = vector.load %arg8[%c0_20, %c0_21] : memref<16x32xf32, #tpu.memory_space<vmem>>, vector<16x32xf32>
    tpu.vector_store %arg8[%c0_20, %c0_21], %35 {strides = array<i32>} : memref<16x32xf32, #tpu.memory_space<vmem>>, vector<16x32xf32>,
    return
  }
  func.func @transform_0(%arg0: i32) -> (i32, i32) {
    %c0_i32 = arith.constant 0 : i32
    %c0_i32_0 = arith.constant 0 : i32
    return %arg0, %c0_i32 : i32, i32
  }
  func.func @transform_1(%arg0: i32) -> (i32, i32) {
    %c0_i32 = arith.constant 0 : i32
    %c0_i32_0 = arith.constant 0 : i32
    %c0_i32_1 = arith.constant 0 : i32
    return %c0_i32, %c0_i32_0 : i32, i32
  }
  func.func @transform_2(%arg0: i32) -> (i32, i32) {
    %c0_i32 = arith.constant 0 : i32
    %c0_i32_0 = arith.constant 0 : i32
    %c0_i32_1 = arith.constant 0 : i32
    return %c0_i32, %c0_i32_0 : i32, i32
  }
  func.func @transform_3(%arg0: i32) -> (i32, i32) {
    %c0_i32 = arith.constant 0 : i32
    %c0_i32_0 = arith.constant 0 : i32
    %c0_i32_1 = arith.constant 0 : i32
    return %c0_i32, %c0_i32_0 : i32, i32
  }
  func.func @transform_4(%arg0: i32) -> (i32, i32) {
    %c0_i32 = arith.constant 0 : i32
    %c0_i32_0 = arith.constant 0 : i32
    %c0_i32_1 = arith.constant 0 : i32
    return %c0_i32, %c0_i32_0 : i32, i32
  }
  func.func @transform_5(%arg0: i32) -> (i32, i32) {
    %c0_i32 = arith.constant 0 : i32
    %c0_i32_0 = arith.constant 0 : i32
    %c0_i32_1 = arith.constant 0 : i32
    return %c0_i32, %c0_i32_0 : i32, i32
  }
  func.func @transform_6(%arg0: i32) -> (i32, i32) {
    %c0_i32 = arith.constant 0 : i32
    %c0_i32_0 = arith.constant 0 : i32
    %c0_i32_1 = arith.constant 0 : i32
    return %c0_i32, %c0_i32_0 : i32, i32
  }
  func.func @transform_7(%arg0: i32) -> (i32, i32) {
    %c0_i32 = arith.constant 0 : i32
    %c0_i32_0 = arith.constant 0 : i32
    return %arg0, %c0_i32 : i32, i32
  }
}

module attributes {stable_mosaic.version = 11 : i64} {
  func.func @ffn_kernel_resident(%arg0: i32, %arg1: memref<16x32xf32, #tpu.memory_space<vmem>>, %arg2: memref<32x64xf32, #tpu.memory_space<vmem>>, %arg3: memref<1x64xf32, #tpu.memory_space<vmem>>, %arg4: memref<64x32xf32, #tpu.memory_space<vmem>>, %arg5: memref<1x32xf32, #tpu.memory_space<vmem>>, %arg6: memref<1x32xf32, #tpu.memory_space<vmem>>, %arg7: memref<1x32xf32, #tpu.memory_space<vmem>>, %arg8: memref<16x32xf32, #tpu.memory_space<vmem>>) attributes {dimension_semantics = [#tpu.dimension_semantics<parallel>], iteration_bounds = array<i64: 1>, scalar_prefetch = 0 : i64, scratch_operands = 0 : i64, tpu.core_type = #tpu.core_type<tc>, window_params = [{transform_indices = @transform_0, window_bounds = array<i64: 16, 32>}, {pipeline_mode = #tpu.pipeline_mode<synchronous>, transform_indices = @transform_1, window_bounds = array<i64: 32, 64>}, {pipeline_mode = #tpu.pipeline_mode<synchronous>, transform_indices = @transform_2, window_bounds = array<i64: 1, 64>}, {pipeline_mode = #tpu.pipeline_mode<synchronous>, transform_indices = @transform_3, window_bounds = array<i64: 64, 32>}, {pipeline_mode = #tpu.pipeline_mode<synchronous>, transform_indices = @transform_4, window_bounds = array<i64: 1, 32>}, {pipeline_mode = #tpu.pipeline_mode<synchronous>, transform_indices = @transform_5, window_bounds = array<i64: 1, 32>}, {pipeline_mode = #tpu.pipeline_mode<synchronous>, transform_indices = @transform_6, window_bounds = array<i64: 1, 32>}, {transform_indices = @transform_7, window_bounds = array<i64: 16, 32>}]} {
    %c0 = arith.constant 0 : index
    %c0_0 = arith.constant 0 : index
    %0 = vector.load %arg1[%c0, %c0_0] : memref<16x32xf32, #tpu.memory_space<vmem>>, vector<16x32xf32>
    %c0_1 = arith.constant 0 : index
    %c0_2 = arith.constant 0 : index
    %1 = vector.load %arg2[%c0_1, %c0_2] : memref<32x64xf32, #tpu.memory_space<vmem>>, vector<32x64xf32>
    %cst = arith.constant dense<0.000000e+00> : vector<16x64xf32>
    %2 = tpu.matmul %0, %1, %cst {dimension_numbers = #tpu.dot_dimension_numbers<[1], [0], [0], [1], [0, 0, 1, 1], [], []>} : vector<16x32xf32>, vector<32x64xf32>, vector<16x64xf32> -> vector<16x64xf32>
    %c0_3 = arith.constant 0 : index
    %c0_4 = arith.constant 0 : index
    %3 = vector.load %arg3[%c0_3, %c0_4] : memref<1x64xf32, #tpu.memory_space<vmem>>, vector<1x64xf32>
    %4 = vector.broadcast %3 : vector<1x64xf32> to vector<16x64xf32>
    %5 = arith.addf %2, %4 : vector<16x64xf32>
    %cst_5 = arith.constant 0.000000e+00 : f32
    %6 = vector.broadcast %cst_5 : f32 to vector<16x64xf32>
    %7 = arith.maximumf %5, %6 : vector<16x64xf32>
    %c0_6 = arith.constant 0 : index
    %c0_7 = arith.constant 0 : index
    %8 = vector.load %arg4[%c0_6, %c0_7] : memref<64x32xf32, #tpu.memory_space<vmem>>, vector<64x32xf32>
    %cst_8 = arith.constant dense<0.000000e+00> : vector<16x32xf32>
    %9 = tpu.matmul %7, %8, %cst_8 {dimension_numbers = #tpu.dot_dimension_numbers<[1], [0], [0], [1], [0, 0, 1, 1], [], []>} : vector<16x64xf32>, vector<64x32xf32>, vector<16x32xf32> -> vector<16x32xf32>
    %c0_9 = arith.constant 0 : index
    %c0_10 = arith.constant 0 : index
    %10 = vector.load %arg5[%c0_9, %c0_10] : memref<1x32xf32, #tpu.memory_space<vmem>>, vector<1x32xf32>
    %11 = vector.broadcast %10 : vector<1x32xf32> to vector<16x32xf32>
    %12 = arith.addf %9, %11 : vector<16x32xf32>
    %13 = arith.addf %12, %0 : vector<16x32xf32>
    %c0_11 = arith.constant 0 : index
    %c0_12 = arith.constant 0 : index
    %14 = vector.load %arg6[%c0_11, %c0_12] : memref<1x32xf32, #tpu.memory_space<vmem>>, vector<1x32xf32>
    %c0_13 = arith.constant 0 : index
    %c0_14 = arith.constant 0 : index
    %15 = vector.load %arg7[%c0_13, %c0_14] : memref<1x32xf32, #tpu.memory_space<vmem>>, vector<1x32xf32>
    %cst_15 = arith.constant dense<0.000000e+00> : vector<16xf32>
    %16 = vector.multi_reduction <add>, %13, %cst_15 [1] : vector<16x32xf32> to vector<16xf32>
    %17 = vector.shape_cast %16 : vector<16xf32> to vector<16x1xf32>
    %cst_16 = arith.constant 3.200000e+01 : f32
    %18 = vector.broadcast %cst_16 : f32 to vector<16x1xf32>
    %19 = arith.divf %17, %18 : vector<16x1xf32>
    %20 = vector.broadcast %19 : vector<16x1xf32> to vector<16x32xf32>
    %21 = arith.subf %13, %20 : vector<16x32xf32>
    %22 = arith.mulf %21, %21 : vector<16x32xf32>
    %cst_17 = arith.constant dense<0.000000e+00> : vector<16xf32>
    %23 = vector.multi_reduction <add>, %22, %cst_17 [1] : vector<16x32xf32> to vector<16xf32>
    %24 = vector.shape_cast %23 : vector<16xf32> to vector<16x1xf32>
    %cst_18 = arith.constant 3.200000e+01 : f32
    %25 = vector.broadcast %cst_18 : f32 to vector<16x1xf32>
    %26 = arith.divf %24, %25 : vector<16x1xf32>
    %cst_19 = arith.constant 9.99999974E-6 : f32
    %27 = vector.broadcast %cst_19 : f32 to vector<16x1xf32>
    %28 = arith.addf %26, %27 : vector<16x1xf32>
    %29 = math.rsqrt %28 : vector<16x1xf32>
    %30 = vector.broadcast %29 : vector<16x1xf32> to vector<16x32xf32>
    %31 = arith.mulf %21, %30 : vector<16x32xf32>
    %32 = vector.broadcast %14 : vector<1x32xf32> to vector<16x32xf32>
    %33 = arith.mulf %31, %32 : vector<16x32xf32>
    %34 = vector.broadcast %15 : vector<1x32xf32> to vector<16x32xf32>
    %35 = arith.addf %33, %34 : vector<16x32xf32>
    %c0_20 = arith.constant 0 : index
    %c0_21 = arith.constant 0 : index
    %36 = vector.load %arg8[%c0_20, %c0_21] : memref<16x32xf32, #tpu.memory_space<vmem>>, vector<16x32xf32>
    tpu.vector_store %arg8[%c0_20, %c0_21], %35 {strides = array<i32>} : memref<16x32xf32, #tpu.memory_space<vmem>>, vector<16x32xf32>,
    return
  }
  func.func @transform_0(%arg0: i32) -> (i32, i32) {
    %c0_i32 = arith.constant 0 : i32
    %c0_i32_0 = arith.constant 0 : i32
    return %arg0, %c0_i32 : i32, i32
  }
  func.func @transform_1(%arg0: i32) -> (i32, i32) {
    %c0_i32 = arith.constant 0 : i32
    %c0_i32_0 = arith.constant 0 : i32
    %c0_i32_1 = arith.constant 0 : i32
    return %c0_i32, %c0_i32_0 : i32, i32
  }
  func.func @transform_2(%arg0: i32) -> (i32, i32) {
    %c0_i32 = arith.constant 0 : i32
    %c0_i32_0 = arith.constant 0 : i32
    %c0_i32_1 = arith.constant 0 : i32
    return %c0_i32, %c0_i32_0 : i32, i32
  }
  func.func @transform_3(%arg0: i32) -> (i32, i32) {
    %c0_i32 = arith.constant 0 : i32
    %c0_i32_0 = arith.constant 0 : i32
    %c0_i32_1 = arith.constant 0 : i32
    return %c0_i32, %c0_i32_0 : i32, i32
  }
  func.func @transform_4(%arg0: i32) -> (i32, i32) {
    %c0_i32 = arith.constant 0 : i32
    %c0_i32_0 = arith.constant 0 : i32
    %c0_i32_1 = arith.constant 0 : i32
    return %c0_i32, %c0_i32_0 : i32, i32
  }
  func.func @transform_5(%arg0: i32) -> (i32, i32) {
    %c0_i32 = arith.constant 0 : i32
    %c0_i32_0 = arith.constant 0 : i32
    %c0_i32_1 = arith.constant 0 : i32
    return %c0_i32, %c0_i32_0 : i32, i32
  }
  func.func @transform_6(%arg0: i32) -> (i32, i32) {
    %c0_i32 = arith.constant 0 : i32
    %c0_i32_0 = arith.constant 0 : i32
    %c0_i32_1 = arith.constant 0 : i32
    return %c0_i32, %c0_i32_0 : i32, i32
  }
  func.func @transform_7(%arg0: i32) -> (i32, i32) {
    %c0_i32 = arith.constant 0 : i32
    %c0_i32_0 = arith.constant 0 : i32
    return %arg0, %c0_i32 : i32, i32
  }
}

</mosaic_0001>

<llo_original>
// kernel: tpu_custom_call.1
$region0: #{tpu_custom_call.1}
  #allocation0 [shape = 'u32[]', space=smem, size = 0x4, offset = 0x4, fixed_abs, tag = 'smem constant byte address 0x4 - core index']
  #allocation1 [shape = 'u32[144,128]{1,0:T(1,128)}', space=vmem, size = 0x12000, scoped, tag = 'internal scratch']
  %s0 = inlined_call_operand.vmem [shape: f32[16,32], index: 0, kind: input, shape index: {}]
  %s1 = inlined_call_operand.vmem [shape: f32[32,64], index: 1, kind: input, shape index: {}]
  %s2 = inlined_call_operand.vmem [shape: f32[1,64], index: 2, kind: input, shape index: {}]
  %s3 = inlined_call_operand.vmem [shape: f32[64,32], index: 3, kind: input, shape index: {}]
  %s4 = inlined_call_operand.vmem [shape: f32[1,32], index: 4, kind: input, shape index: {}]
  %s5 = inlined_call_operand.vmem [shape: f32[1,32], index: 5, kind: input, shape index: {}]
  %s6 = inlined_call_operand.vmem [shape: f32[1,32], index: 6, kind: input, shape index: {}]
  %s7 = inlined_call_operand.hbm [shape: f32[16,32], index: 7, kind: output, shape index: {}]
  %s8 = sld [smem:[#allocation0]]
  $region38: #{tpu_custom_call.1} parent=0
    _
  %s10 = ssub.s32 1, %s8
  %s11 = scalar_select 0, %s10, %s8
  $region1: #{tpu_custom_call.1} parent=0
    #allocation2 [shape = 'u8[8192]{0}', space=vmem, size = 0x2000, scoped, tag = 'output window, operand 0, single buffered']
    #allocation3 [shape = 's32[1]{0}', space=sflag, size = 0x4, scoped, tag = 'scoped memory for tpu_custom_call.1']
    %12 = vsyncpa [#allocation3], 0
    // Predicated region
    $region2: #{tpu_custom_call.1} parent=1 // pred_check
      _
    $region3: #{tpu_custom_call.1} parent=1 // pred_check_branch
      %14 = sbr.rel (0) target = $region5
    $region4: #{tpu_custom_call.1} parent=1 // pred_region
      _
    $region5: #{tpu_custom_call.1} parent=1 // pred_fallthru
      _
    // Predicated region
    $region6: #{tpu_custom_call.1} parent=1 // pred_check
      _
    $region7: #{tpu_custom_call.1} parent=1 // pred_check_branch
      %16 = sbr.rel (0) target = $region9
    $region8: #{tpu_custom_call.1} parent=1 // pred_region
      _
    $region9: #{tpu_custom_call.1} parent=1 // pred_fallthru
      _
    // Predicated region
    $region10: #{tpu_custom_call.1} parent=1 // pred_check
      _
    $region11: #{tpu_custom_call.1} parent=1 // pred_check_branch
      %18 = sbr.rel (0) target = $region13
    $region12: #{tpu_custom_call.1} parent=1 // pred_region
      _
    $region13: #{tpu_custom_call.1} parent=1 // pred_fallthru
      _
    // Predicated region
    $region14: #{tpu_custom_call.1} parent=1 // pred_check
      _
    $region15: #{tpu_custom_call.1} parent=1 // pred_check_branch
      %20 = sbr.rel (0) target = $region17
    $region16: #{tpu_custom_call.1} parent=1 // pred_region
      _
    $region17: #{tpu_custom_call.1} parent=1 // pred_fallthru
      _
    // Predicated region
    $region18: #{tpu_custom_call.1} parent=1 // pred_check
      _
    $region19: #{tpu_custom_call.1} parent=1 // pred_check_branch
      %22 = sbr.rel (0) target = $region21
    $region20: #{tpu_custom_call.1} parent=1 // pred_region
      _
    $region21: #{tpu_custom_call.1} parent=1 // pred_fallthru
      _
    // Predicated region
    $region22: #{tpu_custom_call.1} parent=1 // pred_check
      _
    $region23: #{tpu_custom_call.1} parent=1 // pred_check_branch
      %24 = sbr.rel (0) target = $region25
    $region24: #{tpu_custom_call.1} parent=1 // pred_region
      _
    $region25: #{tpu_custom_call.1} parent=1 // pred_fallthru
      _
    // Predicated region
    $region26: #{tpu_custom_call.1} parent=1 // pred_check
      _
    $region27: #{tpu_custom_call.1} parent=1 // pred_check_branch
      %26 = sbr.rel (0) target = $region29
    $region28: #{tpu_custom_call.1} parent=1 // pred_region
      _
    $region29: #{tpu_custom_call.1} parent=1 // pred_fallthru
      _
    %v27 = vld [vmem:[%s0] sm:$0xff]
    %v28 = vld [vmem:[%s0 + $0x8] sm:$0xff]
    %v29 = vld [vmem:[%s1] sm:$0xff]
    %v30 = vld [vmem:[%s1 + $0x8] sm:$0xff]
    %v31 = vld [vmem:[%s1 + $0x10] sm:$0xff]
    %v32 = vld [vmem:[%s1 + $0x18] sm:$0xff]
    %v33 = vld [vmem:[%s2] sm:$0x1]
    %v35 = vlaneseq
    %v36 = vshrl.u32 %v35, 7
    %v37 = vsub.s32 0, %v36
    %v38 = vrot.slane %v33, %v37
    %vm40 = vcmask 261120
    %v42 = vsel %vm40, %v27, 0
    %v45 = vsel %vm40, %v28, 0
    %47 = vmatprep.subr.mxu0 0.0
    %48 = vmatpush1.msra.mxu0 %v29
    %49 = vmatprep.subr.mxu0 0.0
    %50 = vmatpush1.msra.mxu0 %v30
    %51 = vmatprep.subr.mxu0 0.0
    %52 = vmatpush1.msra.mxu0 %v31
    %53 = vmatprep.subr.mxu0 0.0
    %54 = vmatpush1.msra.mxu0 %v32
    %55 = vmatprep.subr.mxu0 0.0
    %56 = vmatpush1.msra.mxu0 0.0
    %57 = vmatprep.subr.mxu0 0.0
    %58 = vmatpush1.msra.mxu0 0.0
    %59 = vmatprep.subr.mxu0 0.0
    %60 = vmatpush1.msra.mxu0 0.0
    %61 = vmatprep.subr.mxu0 0.0
    %62 = vmatpush1.msra.mxu0 0.0
    %63 = vmatprep.subr.mxu0 0.0
    %64 = vmatpush1.msra.mxu0 0.0
    %65 = vmatprep.subr.mxu0 0.0
    %66 = vmatpush1.msra.mxu0 0.0
    %67 = vmatprep.subr.mxu0 0.0
    %68 = vmatpush1.msra.mxu0 0.0
    %69 = vmatprep.subr.mxu0 0.0
    %70 = vmatpush1.msra.mxu0 0.0
    %71 = vmatprep.subr.mxu0 0.0
    %72 = vmatpush1.msra.mxu0 0.0
    %73 = vmatprep.subr.mxu0 0.0
    %74 = vmatpush1.msra.mxu0 0.0
    %75 = vmatprep.subr.mxu0 0.0
    %76 = vmatpush1.msra.mxu0 0.0
    %77 = vmatprep.subr.mxu0 0.0
    %78 = vmatpush1.msra.mxu0 0.0
    %79 = vmatprep.subr.mxu0 0.0
    %80 = vmatpush1.msra.mxu0 0.0
    %81 = vmatprep.subr.mxu0 0.0
    %82 = vmatpush1.msra.mxu0 0.0
    %83 = vmatprep.subr.mxu0 0.0
    %84 = vmatpush1.msra.mxu0 0.0
    %85 = vmatprep.subr.mxu0 0.0
    %86 = vmatpush1.msra.mxu0 0.0
    %87 = vmatprep.subr.mxu0 0.0
    %88 = vmatpush1.msra.mxu0 0.0
    %89 = vmatprep.subr.mxu0 0.0
    %90 = vmatpush1.msra.mxu0 0.0
    %91 = vmatprep.subr.mxu0 0.0
    %92 = vmatpush1.msra.mxu0 0.0
    %93 = vmatprep.subr.mxu0 0.0
    %94 = vmatpush1.msra.mxu0 0.0
    %95 = vmatprep.subr.mxu0 0.0
    %96 = vmatpush1.msra.mxu0 0.0
    %97 = vmatprep.subr.mxu0 0.0
    %98 = vmatpush1.msra.mxu0 0.0
    %99 = vmatprep.subr.mxu0 0.0
    %100 = vmatpush1.msra.mxu0 0.0
    %101 = vmatprep.subr.mxu0 0.0
    %102 = vmatpush1.msra.mxu0 0.0
    %103 = vmatprep.subr.mxu0 0.0
    %104 = vmatpush1.msra.mxu0 0.0
    %105 = vmatprep.subr.mxu0 0.0
    %106 = vmatpush1.msra.mxu0 0.0
    %107 = vmatprep.subr.mxu0 0.0
    %108 = vmatpush1.msra.mxu0 0.0
    %109 = vmatprep.subr.mxu0 0.0
    %110 = vmatpush1.msra.mxu0 0.0
    %111 = vmatprep.mubr.f32.mxu0 0.0
    %112 = vmatmul.mubr.f32.gmra.mrb[0].mxu0 %v42
    %v113 = vpop.f32.mrb[0].mxu0
    %v114 = vadd.f32 %v38, %v113
    %v115 = vpop.f32.mrb[0].mxu0
    %116 = vmatprep.mubr.f32.mxu0 0.0
    %117 = vmatmul.mubr.f32.gmra.mrb[0].mxu0 %v45
    %v118 = vpop.f32.mrb[0].mxu0
    %v119 = vadd.f32 %v38, %v118
    %v120 = vpop.f32.mrb[0].mxu0
    %121 = vdwg.mxu0
    %v122 = vmax.f32 %v114, 0.0
    %v123 = vmax.f32 %v119, 0.0
    %v124 = vld [vmem:[%s3] sm:$0xff]
    %v125 = vld [vmem:[%s3 + $0x8] sm:$0xff]
    %v126 = vld [vmem:[%s3 + $0x10] sm:$0xff]
    %v127 = vld [vmem:[%s3 + $0x18] sm:$0xff]
    %v128 = vld [vmem:[%s3 + $0x20] sm:$0xff]
    %v129 = vld [vmem:[%s3 + $0x28] sm:$0xff]
    %v130 = vld [vmem:[%s3 + $0x30] sm:$0xff]
    %v131 = vld [vmem:[%s3 + $0x38] sm:$0xff]
    %v132 = vld [vmem:[%s4] sm:$0x1]
    %v134 = vlaneseq
    %v135 = vshrl.u32 %v134, 7
    %v136 = vsub.s32 0, %v135
    %v137 = vrot.slane %v132, %v136
    %vm139 = vcmask 523264
    %v141 = vsel %vm139, %v122, 0
    %v144 = vsel %vm139, %v123, 0
    %146 = vmatprep.subr.mxu0 0.0
    %147 = vmatpush1.msra.mxu0 %v124
    %148 = vmatprep.subr.mxu0 0.0
    %149 = vmatpush1.msra.mxu0 %v125
    %150 = vmatprep.subr.mxu0 0.0
    %151 = vmatpush1.msra.mxu0 %v126
    %152 = vmatprep.subr.mxu0 0.0
    %153 = vmatpush1.msra.mxu0 %v127
    %154 = vmatprep.subr.mxu0 0.0
    %155 = vmatpush1.msra.mxu0 %v128
    %156 = vmatprep.subr.mxu0 0.0
    %157 = vmatpush1.msra.mxu0 %v129
    %158 = vmatprep.subr.mxu0 0.0
    %159 = vmatpush1.msra.mxu0 %v130
    %160 = vmatprep.subr.mxu0 0.0
    %161 = vmatpush1.msra.mxu0 %v131
    %162 = vmatprep.subr.mxu0 0.0
    %163 = vmatpush1.msra.mxu0 0.0
    %164 = vmatprep.subr.mxu0 0.0
    %165 = vmatpush1.msra.mxu0 0.0
    %166 = vmatprep.subr.mxu0 0.0
    %167 = vmatpush1.msra.mxu0 0.0
    %168 = vmatprep.subr.mxu0 0.0
    %169 = vmatpush1.msra.mxu0 0.0
    %170 = vmatprep.subr.mxu0 0.0
    %171 = vmatpush1.msra.mxu0 0.0
    %172 = vmatprep.subr.mxu0 0.0
    %173 = vmatpush1.msra.mxu0 0.0
    %174 = vmatprep.subr.mxu0 0.0
    %175 = vmatpush1.msra.mxu0 0.0
    %176 = vmatprep.subr.mxu0 0.0
    %177 = vmatpush1.msra.mxu0 0.0
    %178 = vmatprep.subr.mxu0 0.0
    %179 = vmatpush1.msra.mxu0 0.0
    %180 = vmatprep.subr.mxu0 0.0
    %181 = vmatpush1.msra.mxu0 0.0
    %182 = vmatprep.subr.mxu0 0.0
    %183 = vmatpush1.msra.mxu0 0.0
    %184 = vmatprep.subr.mxu0 0.0
    %185 = vmatpush1.msra.mxu0 0.0
    %186 = vmatprep.subr.mxu0 0.0
    %187 = vmatpush1.msra.mxu0 0.0
    %188 = vmatprep.subr.mxu0 0.0
    %189 = vmatpush1.msra.mxu0 0.0
    %190 = vmatprep.subr.mxu0 0.0
    %191 = vmatpush1.msra.mxu0 0.0
    %192 = vmatprep.subr.mxu0 0.0
    %193 = vmatpush1.msra.mxu0 0.0
    %194 = vmatprep.subr.mxu0 0.0
    %195 = vmatpush1.msra.mxu0 0.0
    %196 = vmatprep.subr.mxu0 0.0
    %197 = vmatpush1.msra.mxu0 0.0
    %198 = vmatprep.subr.mxu0 0.0
    %199 = vmatpush1.msra.mxu0 0.0
    %200 = vmatprep.subr.mxu0 0.0
    %201 = vmatpush1.msra.mxu0 0.0
    %202 = vmatprep.subr.mxu0 0.0
    %203 = vmatpush1.msra.mxu0 0.0
    %204 = vmatprep.subr.mxu0 0.0
    %205 = vmatpush1.msra.mxu0 0.0
    %206 = vmatprep.subr.mxu0 0.0
    %207 = vmatpush1.msra.mxu0 0.0
    %208 = vmatprep.subr.mxu0 0.0
    %209 = vmatpush1.msra.mxu0 0.0
    %210 = vmatprep.mubr.f32.mxu0 0.0
    %211 = vmatmul.mubr.f32.gmra.mrb[0].mxu0 %v141
    %v212 = vpop.f32.mrb[0].mxu0
    %v213 = vadd.f32 %v137, %v212
    %v214 = vpop.f32.mrb[0].mxu0
    %215 = vmatprep.mubr.f32.mxu0 0.0
    %216 = vmatmul.mubr.f32.gmra.mrb[0].mxu0 %v144
    %v217 = vpop.f32.mrb[0].mxu0
    %v218 = vadd.f32 %v137, %v217
    %v219 = vpop.f32.mrb[0].mxu0
    %220 = vdwg.mxu0
    %v221 = vadd.f32 %v213, %v27
    %v222 = vadd.f32 %v218, %v28
    %v223 = vld [vmem:[%s5] sm:$0x1]
    %v224 = vld [vmem:[%s6] sm:$0x1]
    %v225 = vsel %vm40, %v221, 0.0
    %226 = vadd.xlane.f32.xlu0 %v225
    %v227 = vpop.xlane.xlu0 %226
    %v228 = vsel %vm40, %v222, 0.0
    %229 = vadd.xlane.f32.xlu0 %v228
    %v230 = vpop.xlane.xlu0 %229
    %v231 = vrcp.pop 32.0
    %v232 = vmul.f32 %v227, %v231
    %v233 = vmul.f32 %v230, %v231
    %v234 = vsub.f32 %v221, %v232
    %v235 = vsub.f32 %v222, %v233
    %v236 = vmul.f32 %v234, %v234
    %v237 = vmul.f32 %v235, %v235
    %v238 = vsel %vm40, %v236, 0.0
    %239 = vadd.xlane.f32.xlu0 %v238
    %v240 = vpop.xlane.xlu0 %239
    %v241 = vsel %vm40, %v237, 0.0
    %242 = vadd.xlane.f32.xlu0 %v241
    %v243 = vpop.xlane.xlu0 %242
    %v244 = vmul.f32 %v240, %v231
    %v245 = vmul.f32 %v243, %v231
    %v246 = vadd.f32 %v244, 1e-05
    %v247 = vadd.f32 %v245, 1e-05
    %v248 = vrsqrt.pop %v246
    %v249 = vrsqrt.pop %v247
    %v250 = vmul.f32 %v234, %v248
    %v251 = vmul.f32 %v235, %v249
    %v253 = vlaneseq
    %v254 = vshrl.u32 %v253, 7
    %v255 = vsub.s32 0, %v254
    %v256 = vrot.slane %v223, %v255
    %v258 = vmul.f32 %v250, %v256
    %v259 = vmul.f32 %v251, %v256
    %v261 = vlaneseq
    %v262 = vshrl.u32 %v261, 7
    %v263 = vsub.s32 0, %v262
    %v264 = vrot.slane %v224, %v263
    %v266 = vadd.f32 %v258, %v264
    %v267 = vadd.f32 %v259, %v264
    %268 = vst.msk [vmem:[#allocation2] sm:$0xff] %vm40, %v266
    %269 = vst.msk [vmem:[#allocation2 + $0x8] sm:$0xff] %vm40, %v267
    // Predicated region
    $region30: #{tpu_custom_call.1} parent=1 // pred_check
      _
    $region31: #{tpu_custom_call.1} parent=1 // pred_check_branch
      %271 = sbr.rel (0) target = $region33
    $region32: #{tpu_custom_call.1} parent=1 // pred_region
      %s273 = ssub.s32 256, 256
      %274 = vsyncadd [#allocation3], %s273
      %s275 = sshll.u32 [#allocation2], 4
      %s276 = int_to_ptr.vmem [resolvable:$true] %s275
      %281 = dma.vmem_to_hbm [thread:$0]  %s276, 256, %s7, [#allocation3], 128, 128, 8
    $region33: #{tpu_custom_call.1} parent=1 // pred_fallthru
      _
    // Predicated region
    $region34: #{tpu_custom_call.1} parent=1 // pred_check
      _
    $region35: #{tpu_custom_call.1} parent=1 // pred_check_branch
      %283 = sbr.rel (0) target = $region37
    $region36: #{tpu_custom_call.1} parent=1 // pred_region
      %284 = dma.done [#allocation3], 256
    $region37: #{tpu_custom_call.1} parent=1 // pred_fallthru
      _
    %285 = vsyncpa [#allocation3], 1

// kernel: tpu_custom_call.1
$region0: #{tpu_custom_call.1}
  #allocation0 [shape = 'u32[]', space=smem, size = 0x4, offset = 0x4, fixed_abs, tag = 'smem constant byte address 0x4 - core index']
  #allocation1 [shape = 'u32[144,128]{1,0:T(1,128)}', space=vmem, size = 0x12000, scoped, tag = 'internal scratch']
  %s0 = inlined_call_operand.vmem [shape: f32[16,32], index: 0, kind: input, shape index: {}]
  %s1 = inlined_call_operand.vmem [shape: f32[32,64], index: 1, kind: input, shape index: {}]
  %s2 = inlined_call_operand.vmem [shape: f32[1,64], index: 2, kind: input, shape index: {}]
  %s3 = inlined_call_operand.vmem [shape: f32[64,32], index: 3, kind: input, shape index: {}]
  %s4 = inlined_call_operand.vmem [shape: f32[1,32], index: 4, kind: input, shape index: {}]
  %s5 = inlined_call_operand.vmem [shape: f32[1,32], index: 5, kind: input, shape index: {}]
  %s6 = inlined_call_operand.vmem [shape: f32[1,32], index: 6, kind: input, shape index: {}]
  %s7 = inlined_call_operand.hbm [shape: f32[16,32], index: 7, kind: output, shape index: {}]
  %s8 = sld [smem:[#allocation0]]
  $region38: #{tpu_custom_call.1} parent=0
    _
  %s10 = ssub.s32 1, %s8
  %s11 = scalar_select 0, %s10, %s8
  $region1: #{tpu_custom_call.1} parent=0
    #allocation2 [shape = 'u8[8192]{0}', space=vmem, size = 0x2000, scoped, tag = 'output window, operand 0, single buffered']
    #allocation3 [shape = 's32[1]{0}', space=sflag, size = 0x4, scoped, tag = 'scoped memory for tpu_custom_call.1']
    %12 = vsyncpa [#allocation3], 0
    // Predicated region
    $region2: #{tpu_custom_call.1} parent=1 // pred_check
      _
    $region3: #{tpu_custom_call.1} parent=1 // pred_check_branch
      %14 = sbr.rel (0) target = $region5
    $region4: #{tpu_custom_call.1} parent=1 // pred_region
      _
    $region5: #{tpu_custom_call.1} parent=1 // pred_fallthru
      _
    // Predicated region
    $region6: #{tpu_custom_call.1} parent=1 // pred_check
      _
    $region7: #{tpu_custom_call.1} parent=1 // pred_check_branch
      %16 = sbr.rel (0) target = $region9
    $region8: #{tpu_custom_call.1} parent=1 // pred_region
      _
    $region9: #{tpu_custom_call.1} parent=1 // pred_fallthru
      _
    // Predicated region
    $region10: #{tpu_custom_call.1} parent=1 // pred_check
      _
    $region11: #{tpu_custom_call.1} parent=1 // pred_check_branch
      %18 = sbr.rel (0) target = $region13
    $region12: #{tpu_custom_call.1} parent=1 // pred_region
      _
    $region13: #{tpu_custom_call.1} parent=1 // pred_fallthru
      _
    // Predicated region
    $region14: #{tpu_custom_call.1} parent=1 // pred_check
      _
    $region15: #{tpu_custom_call.1} parent=1 // pred_check_branch
      %20 = sbr.rel (0) target = $region17
    $region16: #{tpu_custom_call.1} parent=1 // pred_region
      _
    $region17: #{tpu_custom_call.1} parent=1 // pred_fallthru
      _
    // Predicated region
    $region18: #{tpu_custom_call.1} parent=1 // pred_check
      _
    $region19: #{tpu_custom_call.1} parent=1 // pred_check_branch
      %22 = sbr.rel (0) target = $region21
    $region20: #{tpu_custom_call.1} parent=1 // pred_region
      _
    $region21: #{tpu_custom_call.1} parent=1 // pred_fallthru
      _
    // Predicated region
    $region22: #{tpu_custom_call.1} parent=1 // pred_check
      _
    $region23: #{tpu_custom_call.1} parent=1 // pred_check_branch
      %24 = sbr.rel (0) target = $region25
    $region24: #{tpu_custom_call.1} parent=1 // pred_region
      _
    $region25: #{tpu_custom_call.1} parent=1 // pred_fallthru
      _
    // Predicated region
    $region26: #{tpu_custom_call.1} parent=1 // pred_check
      _
    $region27: #{tpu_custom_call.1} parent=1 // pred_check_branch
      %26 = sbr.rel (0) target = $region29
    $region28: #{tpu_custom_call.1} parent=1 // pred_region
      _
    $region29: #{tpu_custom_call.1} parent=1 // pred_fallthru
      _
    %v27 = vld [vmem:[%s0] sm:$0xff]
    %v28 = vld [vmem:[%s0 + $0x8] sm:$0xff]
    %v29 = vld [vmem:[%s1] sm:$0xff]
    %v30 = vld [vmem:[%s1 + $0x8] sm:$0xff]
    %v31 = vld [vmem:[%s1 + $0x10] sm:$0xff]
    %v32 = vld [vmem:[%s1 + $0x18] sm:$0xff]
    %v33 = vld [vmem:[%s2] sm:$0x1]
    %v35 = vlaneseq
    %v36 = vshrl.u32 %v35, 7
    %v37 = vsub.s32 0, %v36
    %v38 = vrot.slane %v33, %v37
    %vm40 = vcmask 261120
    %v42 = vsel %vm40, %v27, 0
    %v45 = vsel %vm40, %v28, 0
    %47 = vmatprep.subr.mxu0 0.0
    %48 = vmatpush1.msra.mxu0 %v29
    %49 = vmatprep.subr.mxu0 0.0
    %50 = vmatpush1.msra.mxu0 %v30
    %51 = vmatprep.subr.mxu0 0.0
    %52 = vmatpush1.msra.mxu0 %v31
    %53 = vmatprep.subr.mxu0 0.0
    %54 = vmatpush1.msra.mxu0 %v32
    %55 = vmatprep.subr.mxu0 0.0
    %56 = vmatpush1.msra.mxu0 0.0
    %57 = vmatprep.subr.mxu0 0.0
    %58 = vmatpush1.msra.mxu0 0.0
    %59 = vmatprep.subr.mxu0 0.0
    %60 = vmatpush1.msra.mxu0 0.0
    %61 = vmatprep.subr.mxu0 0.0
    %62 = vmatpush1.msra.mxu0 0.0
    %63 = vmatprep.subr.mxu0 0.0
    %64 = vmatpush1.msra.mxu0 0.0
    %65 = vmatprep.subr.mxu0 0.0
    %66 = vmatpush1.msra.mxu0 0.0
    %67 = vmatprep.subr.mxu0 0.0
    %68 = vmatpush1.msra.mxu0 0.0
    %69 = vmatprep.subr.mxu0 0.0
    %70 = vmatpush1.msra.mxu0 0.0
    %71 = vmatprep.subr.mxu0 0.0
    %72 = vmatpush1.msra.mxu0 0.0
    %73 = vmatprep.subr.mxu0 0.0
    %74 = vmatpush1.msra.mxu0 0.0
    %75 = vmatprep.subr.mxu0 0.0
    %76 = vmatpush1.msra.mxu0 0.0
    %77 = vmatprep.subr.mxu0 0.0
    %78 = vmatpush1.msra.mxu0 0.0
    %79 = vmatprep.subr.mxu0 0.0
    %80 = vmatpush1.msra.mxu0 0.0
    %81 = vmatprep.subr.mxu0 0.0
    %82 = vmatpush1.msra.mxu0 0.0
    %83 = vmatprep.subr.mxu0 0.0
    %84 = vmatpush1.msra.mxu0 0.0
    %85 = vmatprep.subr.mxu0 0.0
    %86 = vmatpush1.msra.mxu0 0.0
    %87 = vmatprep.subr.mxu0 0.0
    %88 = vmatpush1.msra.mxu0 0.0
    %89 = vmatprep.subr.mxu0 0.0
    %90 = vmatpush1.msra.mxu0 0.0
    %91 = vmatprep.subr.mxu0 0.0
    %92 = vmatpush1.msra.mxu0 0.0
    %93 = vmatprep.subr.mxu0 0.0
    %94 = vmatpush1.msra.mxu0 0.0
    %95 = vmatprep.subr.mxu0 0.0
    %96 = vmatpush1.msra.mxu0 0.0
    %97 = vmatprep.subr.mxu0 0.0
    %98 = vmatpush1.msra.mxu0 0.0
    %99 = vmatprep.subr.mxu0 0.0
    %100 = vmatpush1.msra.mxu0 0.0
    %101 = vmatprep.subr.mxu0 0.0
    %102 = vmatpush1.msra.mxu0 0.0
    %103 = vmatprep.subr.mxu0 0.0
    %104 = vmatpush1.msra.mxu0 0.0
    %105 = vmatprep.subr.mxu0 0.0
    %106 = vmatpush1.msra.mxu0 0.0
    %107 = vmatprep.subr.mxu0 0.0
    %108 = vmatpush1.msra.mxu0 0.0
    %109 = vmatprep.subr.mxu0 0.0
    %110 = vmatpush1.msra.mxu0 0.0
    %111 = vmatprep.mubr.f32.mxu0 0.0
    %112 = vmatmul.mubr.f32.gmra.mrb[0].mxu0 %v42
    %v113 = vpop.f32.mrb[0].mxu0
    %v114 = vadd.f32 %v38, %v113
    %v115 = vpop.f32.mrb[0].mxu0
    %116 = vmatprep.mubr.f32.mxu0 0.0
    %117 = vmatmul.mubr.f32.gmra.mrb[0].mxu0 %v45
    %v118 = vpop.f32.mrb[0].mxu0
    %v119 = vadd.f32 %v38, %v118
    %v120 = vpop.f32.mrb[0].mxu0
    %121 = vdwg.mxu0
    %v122 = vmax.f32 %v114, 0.0
    %v123 = vmax.f32 %v119, 0.0
    %v124 = vld [vmem:[%s3] sm:$0xff]
    %v125 = vld [vmem:[%s3 + $0x8] sm:$0xff]
    %v126 = vld [vmem:[%s3 + $0x10] sm:$0xff]
    %v127 = vld [vmem:[%s3 + $0x18] sm:$0xff]
    %v128 = vld [vmem:[%s3 + $0x20] sm:$0xff]
    %v129 = vld [vmem:[%s3 + $0x28] sm:$0xff]
    %v130 = vld [vmem:[%s3 + $0x30] sm:$0xff]
    %v131 = vld [vmem:[%s3 + $0x38] sm:$0xff]
    %v132 = vld [vmem:[%s4] sm:$0x1]
    %v134 = vlaneseq
    %v135 = vshrl.u32 %v134, 7
    %v136 = vsub.s32 0, %v135
    %v137 = vrot.slane %v132, %v136
    %vm139 = vcmask 523264
    %v141 = vsel %vm139, %v122, 0
    %v144 = vsel %vm139, %v123, 0
    %146 = vmatprep.subr.mxu0 0.0
    %147 = vmatpush1.msra.mxu0 %v124
    %148 = vmatprep.subr.mxu0 0.0
    %149 = vmatpush1.msra.mxu0 %v125
    %150 = vmatprep.subr.mxu0 0.0
    %151 = vmatpush1.msra.mxu0 %v126
    %152 = vmatprep.subr.mxu0 0.0
    %153 = vmatpush1.msra.mxu0 %v127
    %154 = vmatprep.subr.mxu0 0.0
    %155 = vmatpush1.msra.mxu0 %v128
    %156 = vmatprep.subr.mxu0 0.0
    %157 = vmatpush1.msra.mxu0 %v129
    %158 = vmatprep.subr.mxu0 0.0
    %159 = vmatpush1.msra.mxu0 %v130
    %160 = vmatprep.subr.mxu0 0.0
    %161 = vmatpush1.msra.mxu0 %v131
    %162 = vmatprep.subr.mxu0 0.0
    %163 = vmatpush1.msra.mxu0 0.0
    %164 = vmatprep.subr.mxu0 0.0
    %165 = vmatpush1.msra.mxu0 0.0
    %166 = vmatprep.subr.mxu0 0.0
    %167 = vmatpush1.msra.mxu0 0.0
    %168 = vmatprep.subr.mxu0 0.0
    %169 = vmatpush1.msra.mxu0 0.0
    %170 = vmatprep.subr.mxu0 0.0
    %171 = vmatpush1.msra.mxu0 0.0
    %172 = vmatprep.subr.mxu0 0.0
    %173 = vmatpush1.msra.mxu0 0.0
    %174 = vmatprep.subr.mxu0 0.0
    %175 = vmatpush1.msra.mxu0 0.0
    %176 = vmatprep.subr.mxu0 0.0
    %177 = vmatpush1.msra.mxu0 0.0
    %178 = vmatprep.subr.mxu0 0.0
    %179 = vmatpush1.msra.mxu0 0.0
    %180 = vmatprep.subr.mxu0 0.0
    %181 = vmatpush1.msra.mxu0 0.0
    %182 = vmatprep.subr.mxu0 0.0
    %183 = vmatpush1.msra.mxu0 0.0
    %184 = vmatprep.subr.mxu0 0.0
    %185 = vmatpush1.msra.mxu0 0.0
    %186 = vmatprep.subr.mxu0 0.0
    %187 = vmatpush1.msra.mxu0 0.0
    %188 = vmatprep.subr.mxu0 0.0
    %189 = vmatpush1.msra.mxu0 0.0
    %190 = vmatprep.subr.mxu0 0.0
    %191 = vmatpush1.msra.mxu0 0.0
    %192 = vmatprep.subr.mxu0 0.0
    %193 = vmatpush1.msra.mxu0 0.0
    %194 = vmatprep.subr.mxu0 0.0
    %195 = vmatpush1.msra.mxu0 0.0
    %196 = vmatprep.subr.mxu0 0.0
    %197 = vmatpush1.msra.mxu0 0.0
    %198 = vmatprep.subr.mxu0 0.0
    %199 = vmatpush1.msra.mxu0 0.0
    %200 = vmatprep.subr.mxu0 0.0
    %201 = vmatpush1.msra.mxu0 0.0
    %202 = vmatprep.subr.mxu0 0.0
    %203 = vmatpush1.msra.mxu0 0.0
    %204 = vmatprep.subr.mxu0 0.0
    %205 = vmatpush1.msra.mxu0 0.0
    %206 = vmatprep.subr.mxu0 0.0
    %207 = vmatpush1.msra.mxu0 0.0
    %208 = vmatprep.subr.mxu0 0.0
    %209 = vmatpush1.msra.mxu0 0.0
    %210 = vmatprep.mubr.f32.mxu0 0.0
    %211 = vmatmul.mubr.f32.gmra.mrb[0].mxu0 %v141
    %v212 = vpop.f32.mrb[0].mxu0
    %v213 = vadd.f32 %v137, %v212
    %v214 = vpop.f32.mrb[0].mxu0
    %215 = vmatprep.mubr.f32.mxu0 0.0
    %216 = vmatmul.mubr.f32.gmra.mrb[0].mxu0 %v144
    %v217 = vpop.f32.mrb[0].mxu0
    %v218 = vadd.f32 %v137, %v217
    %v219 = vpop.f32.mrb[0].mxu0
    %220 = vdwg.mxu0
    %v221 = vadd.f32 %v213, %v27
    %v222 = vadd.f32 %v218, %v28
    %v223 = vld [vmem:[%s5] sm:$0x1]
    %v224 = vld [vmem:[%s6] sm:$0x1]
    %v225 = vsel %vm40, %v221, 0.0
    %226 = vadd.xlane.f32.xlu0 %v225
    %v227 = vpop.xlane.xlu0 %226
    %v228 = vsel %vm40, %v222, 0.0
    %229 = vadd.xlane.f32.xlu0 %v228
    %v230 = vpop.xlane.xlu0 %229
    %v231 = vrcp.pop 32.0
    %v232 = vmul.f32 %v227, %v231
    %v233 = vmul.f32 %v230, %v231
    %v234 = vsub.f32 %v221, %v232
    %v235 = vsub.f32 %v222, %v233
    %v236 = vmul.f32 %v234, %v234
    %v237 = vmul.f32 %v235, %v235
    %v238 = vsel %vm40, %v236, 0.0
    %239 = vadd.xlane.f32.xlu0 %v238
    %v240 = vpop.xlane.xlu0 %239
    %v241 = vsel %vm40, %v237, 0.0
    %242 = vadd.xlane.f32.xlu0 %v241
    %v243 = vpop.xlane.xlu0 %242
    %v244 = vmul.f32 %v240, %v231
    %v245 = vmul.f32 %v243, %v231
    %v246 = vadd.f32 %v244, 1e-05
    %v247 = vadd.f32 %v245, 1e-05
    %v248 = vrsqrt.pop %v246
    %v249 = vrsqrt.pop %v247
    %v250 = vmul.f32 %v234, %v248
    %v251 = vmul.f32 %v235, %v249
    %v253 = vlaneseq
    %v254 = vshrl.u32 %v253, 7
    %v255 = vsub.s32 0, %v254
    %v256 = vrot.slane %v223, %v255
    %v258 = vmul.f32 %v250, %v256
    %v259 = vmul.f32 %v251, %v256
    %v261 = vlaneseq
    %v262 = vshrl.u32 %v261, 7
    %v263 = vsub.s32 0, %v262
    %v264 = vrot.slane %v224, %v263
    %v266 = vadd.f32 %v258, %v264
    %v267 = vadd.f32 %v259, %v264
    %268 = vst.msk [vmem:[#allocation2] sm:$0xff] %vm40, %v266
    %269 = vst.msk [vmem:[#allocation2 + $0x8] sm:$0xff] %vm40, %v267
    // Predicated region
    $region30: #{tpu_custom_call.1} parent=1 // pred_check
      _
    $region31: #{tpu_custom_call.1} parent=1 // pred_check_branch
      %271 = sbr.rel (0) target = $region33
    $region32: #{tpu_custom_call.1} parent=1 // pred_region
      %s273 = ssub.s32 256, 256
      %274 = vsyncadd [#allocation3], %s273
      %s275 = sshll.u32 [#allocation2], 4
      %s276 = int_to_ptr.vmem [resolvable:$true] %s275
      %281 = dma.vmem_to_hbm [thread:$0]  %s276, 256, %s7, [#allocation3], 128, 128, 8
    $region33: #{tpu_custom_call.1} parent=1 // pred_fallthru
      _
    // Predicated region
    $region34: #{tpu_custom_call.1} parent=1 // pred_check
      _
    $region35: #{tpu_custom_call.1} parent=1 // pred_check_branch
      %283 = sbr.rel (0) target = $region37
    $region36: #{tpu_custom_call.1} parent=1 // pred_region
      %284 = dma.done [#allocation3], 256
    $region37: #{tpu_custom_call.1} parent=1 // pred_fallthru
      _
    %285 = vsyncpa [#allocation3], 1

</llo_original>
